<compile_context>
chip_gen: v7x
topology: tpu7x:2x2x1
jax: 0.10.0
libtpu: 0.0.40
codegen_flags: <defaults>
</compile_context>

<pallas_src>
import jax
import jax.numpy as jnp
from jax.experimental import pallas as pl
from jax.experimental.pallas import tpu as pltpu

_LANE = 128
_SUBLANE = 8


def _round_up(n: int, m: int) -> int:
    return ((n + m - 1) // m) * m


def _vmem_budget_bytes() -> int:
    """Conservative per-generation budget for the pipelined working set."""
    kind = ""
    try:
        kind = jax.devices()[0].device_kind.lower()
    except Exception:
        pass
    if "v4" in kind or "v5" in kind:
        return 12 * 1024 * 1024   # 16 MiB scoped default on v5e
    return 24 * 1024 * 1024       # 32 MiB scoped default on v6e / v7x


def _channel_tables(c: int):
    """Per-channel angle rate and sin/cos selector, computed exactly like the
    reference (1 / 10000**(d/half))."""
    half = c // 2
    depths = jnp.arange(half, dtype=jnp.float32) / float(half)
    rate_half = 1.0 / (10000.0 ** depths)                               # (half,)
    rate_ch = jnp.concatenate([rate_half, rate_half])                   # (c,)
    sel_ch = jnp.concatenate([jnp.ones((half,), jnp.float32),
                              jnp.zeros((half,), jnp.float32)])         # (c,)
    return rate_ch, sel_ch


# ---------------------------------------------------------------------------
# Path A: small channel counts (c < 8) -> fold (b, c) into the sublane axis.
# ---------------------------------------------------------------------------

def _rows_kernel(x_ref, aux_ref, o_ref):
    # x_ref/o_ref: (tr, tl); aux_ref: (tr, 2) f32 [rate, sin-selector].
    li = pl.program_id(1)
    tr, tl = x_ref.shape
    rate = aux_ref[:, 0:1]                                      # (tr, 1)
    sel = aux_ref[:, 1:2]                                       # (tr, 1)
    pos = (li * tl
           + jax.lax.broadcasted_iota(jnp.int32, (tr, tl), 1)
           ).astype(jnp.float32)                                # (tr, tl)
    angle = pos * rate
    pe = jnp.where(sel > 0.5, jnp.sin(angle), jnp.cos(angle))   # exact ref math
    o_ref[...] = x_ref[...] + pe.astype(o_ref.dtype)


def _pick_tiles_rows(rows: int, L: int, itemsize: int, budget: int):
    l_up = _round_up(L, _LANE)
    tl = L if L < _LANE else min(l_up, 1024)
    # 2 in + 2 out pipeline buffers of x.dtype + ~5 f32 temporaries for PE math.
    bytes_per_elem = 4 * itemsize + 5 * 4
    max_tr = max(1, budget // (tl * bytes_per_elem))
    if max_tr >= rows:
        tr = rows                                  # full-dim block (always legal)
    else:
        tr = max(_SUBLANE, (max_tr // _SUBLANE) * _SUBLANE)
    # v7x megacore: guarantee >= 2 tiles on some parallel axis when possible.
    if tr >= rows and tl >= l_up and l_up >= 2 * _LANE:
        tl = _round_up(l_up // 2, _LANE)
    return tr, tl


def _forward_rows(x, b, c, h, w, donate_x):
    L = h * w
    rows = b * c
    itemsize = jnp.dtype(x.dtype).itemsize
    budget = _vmem_budget_bytes()
    tr, tl = _pick_tiles_rows(rows, L, itemsize, budget)
    num_r = pl.cdiv(rows, tr)
    num_l = pl.cdiv(L, tl)

    rate_ch, sel_ch = _channel_tables(c)
    aux = jnp.stack([jnp.tile(rate_ch, b), jnp.tile(sel_ch, b)], axis=1)  # (rows, 2)

    x2 = x.reshape(rows, L)   # free, contiguous reshape
    need = tr * tl * (4 * itemsize + 5 * 4)
    vmem_limit = int(min(max(2 * need, 32 * 1024 * 1024), 60 * 1024 * 1024))

    out = pl.pallas_call(
        _rows_kernel,
        out_shape=jax.ShapeDtypeStruct((rows, L), x.dtype),
        grid_spec=pltpu.PrefetchScalarGridSpec(
            num_scalar_prefetch=0,
            grid=(num_r, num_l),
            in_specs=[
                pl.BlockSpec((tr, tl), lambda ri, li: (ri, li)),
                pl.BlockSpec((tr, 2), lambda ri, li: (ri, 0)),
            ],
            out_specs=pl.BlockSpec((tr, tl), lambda ri, li: (ri, li)),
        ),
        compiler_params=pltpu.CompilerParams(
            dimension_semantics=("parallel", "parallel"),
            vmem_limit_bytes=vmem_limit,
        ),
        cost_estimate=pl.CostEstimate(
            flops=2 * rows * L,
            transcendentals=2 * num_r * tr * num_l * tl,
            bytes_accessed=2 * rows * L * itemsize,
        ),
        input_output_aliases=({0: 0} if donate_x else {}),
    )(x2, aux)
    return out.reshape(b, c, h, w)


# ---------------------------------------------------------------------------
# Path B: c >= 8 -> (b, c, L) blocks, PE scratch reused across the batch axis.
# ---------------------------------------------------------------------------

def _batched_kernel(x_ref, aux_ref, o_ref, pe_ref):
    # x_ref/o_ref: (c, tl) (batch dim squeezed); aux_ref: (c, 2); pe_ref: (c, tl).
    li = pl.program_id(0)
    bi = pl.program_id(1)
    c, tl = pe_ref.shape

    # Compute the PE tile once per L-tile; reuse it for every batch element.
    @pl.when(bi == 0)
    def _compute_pe():
        rate = aux_ref[:, 0:1]                                   # (c, 1)
        sel = aux_ref[:, 1:2]                                    # (c, 1)
        pos = (li * tl
               + jax.lax.broadcasted_iota(jnp.int32, (c, tl), 1)
               ).astype(jnp.float32)                             # (c, tl)
        angle = pos * rate
        pe = jnp.where(sel > 0.5, jnp.sin(angle), jnp.cos(angle))
        pe_ref[...] = pe.astype(pe_ref.dtype)                    # single cast

    # Steady state: pure load + add + lane-dense store.
    o_ref[...] = x_ref[...] + pe_ref[...]


def _pick_tl_batched(c: int, L: int, itemsize: int, budget: int) -> int:
    l_up = _round_up(L, _LANE)
    if L < _LANE:
        return L
    # 2 in + 2 out buffers + PE scratch in x.dtype + ~4 f32 temporaries.
    bytes_per_col = c * (5 * itemsize + 4 * 4)
    max_tl = budget // bytes_per_col
    max_tl = max(_LANE, (max_tl // _LANE) * _LANE)
    tl = min(max_tl, l_up, 1024)
    # v7x megacore: keep at least 2 L-tiles (the only parallel axis) if possible.
    if tl >= l_up and l_up >= 2 * _LANE:
        tl = _round_up(l_up // 2, _LANE)
    return tl


def _forward_batched(x, b, c, h, w, donate_x):
    L = h * w
    itemsize = jnp.dtype(x.dtype).itemsize
    budget = _vmem_budget_bytes()
    tl = _pick_tl_batched(c, L, itemsize, budget)
    num_l = pl.cdiv(L, tl)

    rate_ch, sel_ch = _channel_tables(c)
    aux = jnp.stack([rate_ch, sel_ch], axis=1)                   # (c, 2)

    x3 = x.reshape(b, c, L)   # free, contiguous reshape
    need = c * tl * (5 * itemsize + 4 * 4)
    # If a huge C forced the 128-lane floor, raise the scoped VMEM limit instead
    # of failing (channel tiling would only be needed for absurdly large C).
    vmem_limit = int(min(max(2 * need, 32 * 1024 * 1024), 60 * 1024 * 1024))

    out = pl.pallas_call(
        _batched_kernel,
        out_shape=jax.ShapeDtypeStruct((b, c, L), x.dtype),
        grid_spec=pltpu.PrefetchScalarGridSpec(
            num_scalar_prefetch=0,
            grid=(num_l, b),   # batch innermost -> PE scratch reused across b
            in_specs=[
                pl.BlockSpec((None, c, tl), lambda li, bi: (bi, 0, li)),
                pl.BlockSpec((c, 2), lambda li, bi: (0, 0)),
            ],
            out_specs=pl.BlockSpec((None, c, tl), lambda li, bi: (bi, 0, li)),
            scratch_shapes=[pltpu.VMEM((c, tl), x.dtype)],
        ),
        compiler_params=pltpu.CompilerParams(
            # L-tiles are independent (megacore-shardable); batch must stay
            # sequential so the program_id(1) == 0 scratch-init guard is valid.
            dimension_semantics=("parallel", "arbitrary"),
            vmem_limit_bytes=vmem_limit,
        ),
        cost_estimate=pl.CostEstimate(
            flops=2 * b * c * L,
            transcendentals=2 * c * num_l * tl,
            bytes_accessed=2 * b * c * L * itemsize,
        ),
        input_output_aliases=({0: 0} if donate_x else {}),
    )(x3, aux)
    return out.reshape(b, c, h, w)


# ---------------------------------------------------------------------------
# Public entry point
# ---------------------------------------------------------------------------

def positional_encoding_forward(x: jax.Array, donate_x: bool = False) -> jax.Array:
    """x: (b, c, h, w), c even. Returns x + positional encoding, same shape.

    Set donate_x=True only when x's buffer may be overwritten (e.g. inside a
    larger jitted graph with donated inputs) to halve peak HBM footprint."""
    b, c, h, w = x.shape
    assert c % 2 == 0, "channel count must be even"
    if c < 8:
        return _forward_rows(x, b, c, h, w, donate_x)
    return _forward_batched(x, b, c, h, w, donate_x)


def _reference(x: jax.Array) -> jax.Array:
    # Pure-JAX reference mirroring the PyTorch module.
    b, c, h, w = x.shape
    L = h * w
    half = c // 2
    positions = jnp.arange(L, dtype=jnp.float32)
    depths = jnp.arange(half, dtype=jnp.float32) / float(half)
    angle_rates = 1.0 / (10000.0 ** depths)
    angle_rads = jnp.einsum("i,j->ij", positions, angle_rates)            # (L, half)
    pe = jnp.concatenate([jnp.sin(angle_rads), jnp.cos(angle_rads)], -1)  # (L, c)
    pe = jnp.transpose(pe, (1, 0))[None]                                  # (1, c, L)
    return (x.reshape(b, c, L) + pe).reshape(b, c, h, w)


if __name__ == "__main__":
    fwd = jax.jit(positional_encoding_forward)

    # Small-channel path (c < 8): sublane-packed (b*c, L) layout, 2 L-tiles.
    b, c, h, w = 2, 4, 16, 16
    x = jax.random.normal(jax.random.PRNGKey(0), (b, c, h, w), dtype=jnp.float32)
    out = fwd(x)
    jax.block_until_ready(out)
    ref = _reference(x)
    assert out.shape == (b, c, h, w)
    assert jnp.allclose(out, ref, atol=1e-5, rtol=1e-5), "mismatch (rows path)"

    # Wider-channel path (c >= 8) with a ragged final L-tile (L = 130, no padding).
    b2, c2, h2, w2 = 2, 8, 10, 13
    x2 = jax.random.normal(jax.random.PRNGKey(1), (b2, c2, h2, w2), dtype=jnp.float32)
    out2 = fwd(x2)
    jax.block_until_ready(out2)
    ref2 = _reference(x2)
    assert out2.shape == (b2, c2, h2, w2)
    assert jnp.allclose(out2, ref2, atol=1e-5, rtol=1e-5), "mismatch (batched path)"

    print("KERNEL_OK")
</pallas_src>

<mosaic_0001>
module attributes {stable_mosaic.version = 11 : i64} {
  func.func @_rows_kernel(%arg0: i32, %arg1: i32, %arg2: memref<8x128xf32, #tpu.memory_space<vmem>>, %arg3: memref<8x2xf32, #tpu.memory_space<vmem>>, %arg4: memref<8x128xf32, #tpu.memory_space<vmem>>) attributes {dimension_semantics = [#tpu.dimension_semantics<parallel>, #tpu.dimension_semantics<parallel>], iteration_bounds = array<i64: 1, 2>, scalar_prefetch = 0 : i64, scratch_operands = 0 : i64, tpu.core_type = #tpu.core_type<tc>, window_params = [{transform_indices = @transform_0, window_bounds = array<i64: 8, 128>}, {transform_indices = @transform_1, window_bounds = array<i64: 8, 2>}, {transform_indices = @transform_2, window_bounds = array<i64: 8, 128>}]} {
    %c0 = arith.constant 0 : index
    %c0_0 = arith.constant 0 : index
    %0 = vector.load %arg3[%c0, %c0_0] : memref<8x2xf32, #tpu.memory_space<vmem>>, vector<8x1xf32>
    %c0_1 = arith.constant 0 : index
    %c1 = arith.constant 1 : index
    %1 = vector.load %arg3[%c0_1, %c1] : memref<8x2xf32, #tpu.memory_space<vmem>>, vector<8x1xf32>
    %c128_i32 = arith.constant 128 : i32
    %2 = arith.muli %arg1, %c128_i32 : i32
    %3 = tpu.iota {dimensions = array<i32: 1>} : vector<8x128xi32>
    %4 = vector.broadcast %2 : i32 to vector<8x128xi32>
    %5 = arith.addi %4, %3 : vector<8x128xi32>
    %6 = arith.sitofp %5 : vector<8x128xi32> to vector<8x128xf32>
    %7 = vector.broadcast %0 : vector<8x1xf32> to vector<8x128xf32>
    %8 = arith.mulf %6, %7 : vector<8x128xf32>
    %cst = arith.constant 5.000000e-01 : f32
    %9 = vector.broadcast %cst : f32 to vector<8x1xf32>
    %10 = arith.cmpf ogt, %1, %9 : vector<8x1xf32>
    %11 = math.sin %8 : vector<8x128xf32>
    %12 = math.cos %8 : vector<8x128xf32>
    %13 = vector.shape_cast %10 : vector<8x1xi1> to vector<8x1xi1>
    %14 = vector.broadcast %13 : vector<8x1xi1> to vector<8x128xi1>
    %15 = arith.select %14, %11, %12 : vector<8x128xi1>, vector<8x128xf32>
    %c0_2 = arith.constant 0 : index
    %c0_3 = arith.constant 0 : index
    %16 = vector.load %arg2[%c0_2, %c0_3] : memref<8x128xf32, #tpu.memory_space<vmem>>, vector<8x128xf32>
    %17 = arith.addf %16, %15 : vector<8x128xf32>
    %c0_4 = arith.constant 0 : index
    %c0_5 = arith.constant 0 : index
    %18 = vector.load %arg4[%c0_4, %c0_5] : memref<8x128xf32, #tpu.memory_space<vmem>>, vector<8x128xf32>
    tpu.vector_store %arg4[%c0_4, %c0_5], %17 {strides = array<i32>} : memref<8x128xf32, #tpu.memory_space<vmem>>, vector<8x128xf32>,
    return
  }
  func.func @transform_0(%arg0: i32, %arg1: i32) -> (i32, i32) {
    %c0_i32 = arith.constant 0 : i32
    return %arg0, %arg1 : i32, i32
  }
  func.func @transform_1(%arg0: i32, %arg1: i32) -> (i32, i32) {
    %c0_i32 = arith.constant 0 : i32
    %c0_i32_0 = arith.constant 0 : i32
    return %arg0, %c0_i32 : i32, i32
  }
  func.func @transform_2(%arg0: i32, %arg1: i32) -> (i32, i32) {
    %c0_i32 = arith.constant 0 : i32
    return %arg0, %arg1 : i32, i32
  }
}

</mosaic_0001>

<llo_original>
// kernel: tile.12
$region0: #{tile.12}
  #allocation0 [shape = 's32[1]{0}', space=sflag, size = 0x4, scoped, tag = 'scoped memory for tile.12']
  %s0 = inlined_call_operand.vmem [shape: f32[4], index: 0, kind: input, shape index: {}]
  %s1 = inlined_call_operand.vmem [shape: f32[2,4], index: 1, kind: output, shape index: {}]
  // Predicated region
  $region2: #{tile.12} parent=0 // pred_check
    _
  $region3: #{tile.12} parent=0 // pred_check_branch
    %3 = sbr.rel (0) target = $region5
  $region4: #{tile.12} parent=0 // pred_region
    _
  $region5: #{tile.12} parent=0 // pred_fallthru
    _
  %v4 = vld [vmem:[%s0] ss:$0 sm:$0xff]
  %5 = vst [vmem:[%s1] sm:$0x3] %v4

// kernel: tile.16
$region0: #{tile.16}
  %s0 = inlined_call_operand.vmem [shape: f32[2,4], index: 0, kind: input, shape index: {}]
  %s1 = inlined_call_operand.vmem [shape: f32[8,1], index: 1, kind: output, shape index: {}]
  $region1: #{tile.16} parent=0
    #allocation0 [shape = 'u8[4096]{0}', space=vmem, size = 0x1000, scoped, tag = 'scoped mem for output reshape']
    #allocation1 [shape = 'u8[4096]{0}', space=vmem, size = 0x1000, scoped, tag = 'scoped mem for input reshape']
    %s3 = sshllo.u32 0, 2
    %v4 = vld [vmem:[%s0] sm:%s3]
    %5 = vst [vmem:[#allocation1] sm:%s3] %v4
    %v6 = vld [vmem:[#allocation1] sm:$0x1]
    %vm7 = vcmask 31744
    %8 = vst.msk [vmem:[#allocation0] sm:$0x1] %vm7, %v6
    %s9 = scalar_lea.vmem [#allocation1], 1
    %v10 = vld [vmem:[%s9] sm:$0x1]
    %11 = vrot.lane.b32.xlu0 %v10, 4
    %v12 = vpop.permute.xlu0 %11
    %vm13 = vcmask 64544
    %14 = vst.msk [vmem:[#allocation0] sm:$0x1] %vm13, %v12
    %s16 = sshllo.u32 0, 1
    %v18 = vld [vmem:[#allocation0] sm:%s16]
    %s19 = sshllo.u32 0, 1
    %20 = vst [vmem:[%s1] sm:%s19] %v18

// kernel: positional_encoding_forward.1
$region0: #{positional_encoding_forward.1}
  #allocation0 [shape = 'u32[]', space=smem, size = 0x4, offset = 0x4, fixed_abs, tag = 'smem constant byte address 0x4 - core index']
  #allocation1 [shape = 'u32[144,128]{1,0:T(1,128)}', space=vmem, size = 0x12000, scoped, tag = 'internal scratch']
  %s0 = inlined_call_operand.vmem [shape: f32[8,256], index: 0, kind: input, shape index: {}]
  %s1 = inlined_call_operand.vmem [shape: f32[8,2], index: 1, kind: input, shape index: {}]
  %s2 = inlined_call_operand.vmem [shape: f32[8,256], index: 2, kind: output, shape index: {}]
  %s3 = sld [smem:[#allocation0]]
  $region41: #{positional_encoding_forward.1} parent=0
    _
  %s5 = ssub.s32 1, %s3
  %s6 = scalar_select 0, %s5, %s3
  loop: start=0, step=1, limit=4
  $region2: #{positional_encoding_forward.1} parent=0 // loop_pre_header
    _
  $region3: #{positional_encoding_forward.1} parent=0 // loop_header
    %s8 = sphi 0, %s12
    %p9 = scmp.ge.s32.totalorder %s8, 4
    %s15 = sphi 0, %s27
    %s16 = sphi 0, %s23
    %s17 = sphi 0, %s15
    %s18 = sphi 0, %s16
    %s19 = sphi 0, %s17
    %s20 = sphi 0, %s18
    %s32 = sphi 0, %s34
    %s35 = sphi 0, %s32
    %s36 = sphi 0, %s35
    %s52 = sphi 0, %s36
    %s58 = sphi 0, %s60
    %s61 = sphi 0, %s58
    %s62 = sphi 0, %s61
    %s78 = sphi 0, %s62
    %s86 = sphi 0, %s88
    %s89 = sphi 0, %s86
    %s90 = sphi 0, %s89
    %s106 = sphi 0, %s90
  $region4: #{positional_encoding_forward.1} parent=0 // loop_header_branch
    %11 = sbr.rel (%p9) target = $region8
  $region5: #{positional_encoding_forward.1} parent=0 // loop_body
    %s13 = ssub.s32 %s8, 1
    %s14 = ssub.s32 %s8, 2
    %s21 = sadd.s32 1, %s16
    %p22 = scmp.ge.s32.totalorder %s21, 2
    %s23 = scalar_select %p22, 0, %s21
    %s24 = sadd.s32 1, %s15
    %s25 = scalar_select %p22, %s24, %s15
    %p26 = scmp.ge.s32.totalorder %s25, 1
    %s27 = scalar_select %p26, 0, %s25
    %s28 = ssub.s32 %s15, %s27
    %s29 = ssub.s32 %s16, %s23
    %s30 = sor.u32 %s28, %s29
    %p31 = scmp.eq.s32.totalorder %s30, 0
    %s33 = sadd.s32 %s32, 1
    %s34 = scalar_select %p31, %s32, %s33
    %p37 = pneg %p31
    %p38 = scmp.eq.s32.totalorder %s8, 1
    %p39 = por %p37, %p38
    %p40 = scmp.ne.s32.totalorder %s32, %s35
    %p41 = scmp.eq.s32.totalorder %s8, 0
    %p42 = por %p40, %p41
    %p43 = scmp.ne.s32.totalorder %s32, %s35
    %p44 = scmp.eq.s32.totalorder %s13, 1
    %p45 = por %p43, %p44
    %p46 = scmp.ne.s32.totalorder %s35, %s36
    %p47 = scmp.eq.s32.totalorder %s13, 0
    %p48 = por %p46, %p47
    %p49 = scmp.ne.s32.totalorder %s35, %s36
    %p50 = scmp.eq.s32.totalorder %s14, 1
    %p51 = por %p49, %p50
    %p53 = scmp.ne.s32.totalorder %s36, %s52
    %p54 = scmp.eq.s32.totalorder %s14, 0
    %p55 = por %p53, %p54
    %s56 = ssub.s32 %s15, %s27
    %p57 = scmp.eq.s32.totalorder %s56, 0
    %s59 = sadd.s32 %s58, 1
    %s60 = scalar_select %p57, %s58, %s59
    %p63 = pneg %p57
    %p64 = scmp.eq.s32.totalorder %s8, 1
    %p65 = por %p63, %p64
    %p66 = scmp.ne.s32.totalorder %s58, %s61
    %p67 = scmp.eq.s32.totalorder %s8, 0
    %p68 = por %p66, %p67
    %p69 = scmp.ne.s32.totalorder %s58, %s61
    %p70 = scmp.eq.s32.totalorder %s13, 1
    %p71 = por %p69, %p70
    %p72 = scmp.ne.s32.totalorder %s61, %s62
    %p73 = scmp.eq.s32.totalorder %s13, 0
    %p74 = por %p72, %p73
    %p75 = scmp.ne.s32.totalorder %s61, %s62
    %p76 = scmp.eq.s32.totalorder %s14, 1
    %p77 = por %p75, %p76
    %p79 = scmp.ne.s32.totalorder %s62, %s78
    %p80 = scmp.eq.s32.totalorder %s14, 0
    %p81 = por %p79, %p80
    %s82 = ssub.s32 %s15, %s27
    %s83 = ssub.s32 %s16, %s23
    %s84 = sor.u32 %s82, %s83
    %p85 = scmp.eq.s32.totalorder %s84, 0
    %s87 = sadd.s32 %s86, 1
    %s88 = scalar_select %p85, %s86, %s87
    %p91 = pneg %p85
    %p92 = scmp.eq.s32.totalorder %s8, 1
    %p93 = por %p91, %p92
    %p94 = scmp.ne.s32.totalorder %s86, %s89
    %p95 = scmp.eq.s32.totalorder %s8, 0
    %p96 = por %p94, %p95
    %p97 = scmp.ne.s32.totalorder %s86, %s89
    %p98 = scmp.eq.s32.totalorder %s13, 1
    %p99 = por %p97, %p98
    %p100 = scmp.ne.s32.totalorder %s89, %s90
    %p101 = scmp.eq.s32.totalorder %s13, 0
    %p102 = por %p100, %p101
    %p103 = scmp.ne.s32.totalorder %s89, %s90
    %p104 = scmp.eq.s32.totalorder %s14, 1
    %p105 = por %p103, %p104
    %p107 = scmp.ne.s32.totalorder %s90, %s106
    %p108 = scmp.eq.s32.totalorder %s14, 0
    %p109 = por %p107, %p108
    %p110 = scmp.le.s32.totalorder 1, %s8
    %p111 = scmp.lt.s32.totalorder %s8, 3
    %p112 = pnand %p110, %p111
    %p113 = pneg %p112
    // Predicated region
    $region9: #{positional_encoding_forward.1} parent=5 // pred_check
      _
    $region10: #{positional_encoding_forward.1} parent=5 // pred_check_branch
      %115 = sbr.rel (%p112) target = $region12
    $region11: #{positional_encoding_forward.1} parent=5 // pred_region
      %s116 = ssub.s32 %s8, 1
      // Predicated region
      $region13: #{positional_encoding_forward.1} parent=11 // pred_check
        %p117 = pneg %p74
      $region14: #{positional_encoding_forward.1} parent=11 // pred_check_branch
        %119 = sbr.rel (%p117) target = $region16
      $region15: #{positional_encoding_forward.1} parent=11 // pred_region
        %p120 = scmp.lt.s32.totalorder %s17, 0
        %s121 = scalar_select %p120, %s17, 0
        %s122 = smul.addr %s121, 8
        %s123 = scalar_lea.vmem %s1, %s122
      $region16: #{positional_encoding_forward.1} parent=11 // pred_fallthru
        _
    $region12: #{positional_encoding_forward.1} parent=5 // pred_fallthru
      _
    %p124 = scmp.lt.s32.totalorder %s8, 2
    // Predicated region
    $region17: #{positional_encoding_forward.1} parent=5 // pred_check
      %p125 = pneg %p124
    $region18: #{positional_encoding_forward.1} parent=5 // pred_check_branch
      %127 = sbr.rel (%p125) target = $region20
    $region19: #{positional_encoding_forward.1} parent=5 // pred_region
      // Predicated region
      $region21: #{positional_encoding_forward.1} parent=19 // pred_check
        %p128 = pneg %p42
      $region22: #{positional_encoding_forward.1} parent=19 // pred_check_branch
        %130 = sbr.rel (%p128) target = $region24
      $region23: #{positional_encoding_forward.1} parent=19 // pred_region
        %p131 = scmp.lt.s32.totalorder %s15, 0
        %s132 = scalar_select %p131, %s15, 0
        %p133 = scmp.lt.s32.totalorder %s16, 1
        %s134 = scalar_select %p133, %s16, 1
        %s135 = smul.addr %s132, 2
        %s136 = sadd.s32 %s134, %s135
        %s137 = smul.addr %s136, 8
        %s138 = scalar_lea.vmem %s0, %s137
      $region24: #{positional_encoding_forward.1} parent=19 // pred_fallthru
        _
    $region20: #{positional_encoding_forward.1} parent=5 // pred_fallthru
      _
    %p139 = scmp.le.s32.totalorder 1, %s8
    %p140 = scmp.lt.s32.totalorder %s8, 3
    %p141 = pnand %p139, %p140
    %p142 = pneg %p141
    // Predicated region
    $region25: #{positional_encoding_forward.1} parent=5 // pred_check
      _
    $region26: #{positional_encoding_forward.1} parent=5 // pred_check_branch
      %144 = sbr.rel (%p141) target = $region28
    $region27: #{positional_encoding_forward.1} parent=5 // pred_region
      %s145 = ssub.s32 %s8, 1
      %p146 = scmp.lt.s32.totalorder %s17, 0
      %s147 = scalar_select %p146, %s17, 0
      %p148 = scmp.lt.s32.totalorder %s18, 1
      %s149 = scalar_select %p148, %s18, 1
      %s150 = smul.addr %s147, 2
      %s151 = sadd.s32 %s149, %s150
      %s152 = smul.addr %s151, 8
      %s153 = scalar_lea.vmem %s0, %s152
      %p154 = pneg %p48
      %p155 = pneg %p45
      %p156 = scmp.lt.s32.totalorder %s17, 0
      %s157 = scalar_select %p156, %s17, 0
      %s158 = smul.addr %s157, 8
      %s159 = scalar_lea.vmem %s1, %s158
      %p160 = pneg %p74
      %p161 = pneg %p71
      %p162 = pneg %p102
      %p163 = pneg %p99
      %p164 = scmp.lt.s32.totalorder %s17, 0
      %s165 = scalar_select %p164, %s17, 0
      %p166 = scmp.lt.s32.totalorder %s18, 1
      %s167 = scalar_select %p166, %s18, 1
      %s168 = smul.addr %s165, 2
      %s169 = sadd.s32 %s167, %s168
      %s170 = smul.addr %s169, 8
      %s171 = scalar_lea.vmem %s2, %s170
      %p172 = scmp.lt.s32.totalorder %s17, 0
      %s173 = scalar_select %p172, %s17, 0
      %p174 = scmp.lt.s32.totalorder %s18, 1
      %s175 = scalar_select %p174, %s18, 1
      %s176 = smul.addr %s173, 2
      %s177 = sadd.s32 %s175, %s176
      %s178 = smul.addr %s177, 8
      %s179 = scalar_lea.vmem %s0, %s178
      %p180 = scmp.lt.s32.totalorder %s17, 0
      %s181 = scalar_select %p180, %s17, 0
      %s182 = smul.addr %s181, 8
      %s183 = scalar_lea.vmem %s1, %s182
      %p184 = scmp.lt.s32.totalorder %s17, 0
      %s185 = scalar_select %p184, %s17, 0
      %p186 = scmp.lt.s32.totalorder %s18, 1
      %s187 = scalar_select %p186, %s18, 1
      %s188 = smul.addr %s185, 2
      %s189 = sadd.s32 %s187, %s188
      %s190 = smul.addr %s189, 8
      %s191 = scalar_lea.vmem %s2, %s190
      %v192 = vld [vmem:[%s183] sm:$0xff]
      %s193 = smul.u32 %s18, 128
      %v194 = vlaneseq
      %v195 = vand.u32 %v194, 127
      %v196 = vstv %s193
      %v197 = vadd.s32 %v196, %v195
      %v198 = vcvt.s32.f32 %v197
      %200 = vset.pattern.permute.xlu0 0
      %201 = vperm.xlu0 %200, %v192
      %v202 = vpop.permute.xlu0 %201
      %v204 = vmul.f32 %v198, %v202
      %vm205 = vcmp.gt.f32.partialorder %v192, 0.5
      %v206 = vand.u32 2147483647, %v204
      %vm207 = vcmp.le.f32.partialorder %v206, 0.7853982
      %vm208 = vcmp.lt.s32.totalorder %v204, 0
      %v209 = vand.u32 %v204, 2139095040
      %v210 = vshrl.u32 %v209, 23
      %v211 = vsub.s32 %v210, 127
      %v212 = vand.u32 2147483647, %v204
      %v213 = vand.u32 %v212, 8388607
      %v214 = vor.u32 %v213, 8388608
      %v215 = vsub.s32 0, %v214
      %v216 = vadd.s32 %v211, 1
      %vm217 = vcmp.gt.s32.totalorder %v216, 0
      %v218 = vsel %vm217, %v216, 0
      %v219 = vshrl.u32 %v218, 5
      %v220 = vand.u32 %v218, 31
      %v221 = vsub.s32 32, %v220
      %v222 = vshrl.u32 683565275, %v221
      %v223 = vshll.u32 683565275, %v220
      %v224 = vshrl.u32 2475754826, %v221
      %v225 = vor.u32 %v223, %v224
      %v226 = vshll.u32 2475754826, %v220
      %v227 = vshrl.u32 2131351028, %v221
      %v228 = vor.u32 %v226, %v227
      %v229 = vshll.u32 2131351028, %v220
      %v230 = vshrl.u32 2102212464, %v221
      %v231 = vor.u32 %v229, %v230
      %v232 = vshll.u32 2102212464, %v220
      %v233 = vshrl.u32 920167782, %v221
      %v234 = vor.u32 %v232, %v233
      %v235 = vshll.u32 920167782, %v220
      %v236 = vshrl.u32 1326507024, %v221
      %v237 = vor.u32 %v235, %v236
      %vm238 = vcmp.lt.s32.totalorder %v219, 1
      %vm239 = vcmp.lt.s32.totalorder %v219, 2
      %vm240 = vcmp.lt.s32.totalorder %v219, 3
      %vm241 = vcmp.lt.s32.totalorder %v219, 4
      %v242 = vsel %vm238, %v222, %v225
      %v243 = vsel %vm241, %v231, 2102212464
      %v244 = vsel %vm240, %v228, %v243
      %v245 = vsel %vm239, %v242, %v244
      %v246 = vsel %vm238, %v225, %v228
      %v247 = vsel %vm241, %v234, 920167782
      %v248 = vsel %vm240, %v231, %v247
      %v249 = vsel %vm239, %v246, %v248
      %v250 = vsel %vm238, %v228, %v231
      %v251 = vsel %vm241, %v237, 1326507024
      %v252 = vsel %vm240, %v234, %v251
      %v253 = vsel %vm239, %v250, %v252
      %v254 = vshll.u32 %v214, 8
      %v255 = vmul.u32.u64.compose %v254, %v253
      %v256 = vextract.low.u32 %v255
      %v257 = vextract.high.u32 %v255
      %v258 = vmul.u32.u64.compose %v254, %v249
      %v259 = vextract.low.u32 %v258
      %v260 = vextract.high.u32 %v258
      %v261 = vmul.u32 %v254, %v245
      %v262 = vadd.s32 %v257, %v259
      %vm263 = vc.u32 %v257, %v259
      %v264 = vadd.s32 %v260, 1
      %v265 = vsel %vm263, %v264, %v260
      %v266 = vadd.s32 %v261, %v265
      %v267 = vadd.s32 %v266, 536870912
      %v268 = vshrl.u32 %v267, 30
      %v269 = vshll.u32 %v268, 30
      %v270 = vsub.s32 %v266, %v269
      %vm271 = vcmp.lt.s32.totalorder %v270, 0
      %v272 = vsub.s32 0, %v270
      %v273 = vsel %vm271, %v272, %v270
      %v274 = vclz %v273
      %v275 = vsub.s32 %v274, 2
      %vm276 = vcmp.gt.s32.totalorder 0, %v275
      %v277 = vsel %vm276, 0, %v275
      %v278 = vsub.s32 32, %v277
      %v279 = vshll.u32 %v270, %v277
      %v280 = vshrl.u32 %v262, %v278
      %v281 = vor.u32 %v279, %v280
      %v282 = vsub.s32 4294967266, %v277
      %v283 = vadd.s32 %v282, 127
      %v284 = vshll.u32 %v283, 23
      %v285 = vor.u32 4788187, %v284
      %v286 = vand.u32 2147483647, %v285
      %v288 = vcvt.s32.f32 %v281
      %v289 = vmul.f32 %v288, %v286
      %v290 = vxor.u32 %v289, 2147483648
      %v291 = vsel %vm208, %v290, %v289
      %v292 = vsub.s32 4, %v268
      %v293 = vsel %vm208, %v292, %v268
      %v294 = vsel %vm207, %v204, %v291
      %v295 = vsel %vm207, 0, %v293
      %v296 = vcosq.f32.pop %v294
      %v297 = vsinq.f32.pop %v294
      %vm298 = vweird.f32 %v204
      %v299 = vadd.s32 %v295, 3
      %v300 = vand.u32 %v299, 3
      %vm301 = vcmp.lt.s32.totalorder %v300, 2
      %vm302 = vcmp.eq.s32.totalorder %v300, 0
      %v303 = vxor.u32 %v297, 2147483648
      %v304 = vsel %vm302, %v296, %v303
      %vm305 = vcmp.eq.s32.totalorder %v300, 2
      %v306 = vxor.u32 %v296, 2147483648
      %v307 = vsel %vm305, %v306, %v297
      %v308 = vsel %vm301, %v304, %v307
      %v309 = vsel %vm298, nan, %v308
      %v310 = vand.u32 2147483647, %v204
      %vm311 = vcmp.le.f32.partialorder %v310, 0.7853982
      %vm312 = vcmp.lt.s32.totalorder %v204, 0
      %v313 = vand.u32 %v204, 2139095040
      %v314 = vshrl.u32 %v313, 23
      %v315 = vsub.s32 %v314, 127
      %v316 = vand.u32 2147483647, %v204
      %v317 = vand.u32 %v316, 8388607
      %v318 = vor.u32 %v317, 8388608
      %v319 = vsub.s32 0, %v318
      %v320 = vadd.s32 %v315, 1
      %vm321 = vcmp.gt.s32.totalorder %v320, 0
      %v322 = vsel %vm321, %v320, 0
      %v323 = vshrl.u32 %v322, 5
      %v324 = vand.u32 %v322, 31
      %v325 = vsub.s32 32, %v324
      %v326 = vshrl.u32 683565275, %v325
      %v327 = vshll.u32 683565275, %v324
      %v328 = vshrl.u32 2475754826, %v325
      %v329 = vor.u32 %v327, %v328
      %v330 = vshll.u32 2475754826, %v324
      %v331 = vshrl.u32 2131351028, %v325
      %v332 = vor.u32 %v330, %v331
      %v333 = vshll.u32 2131351028, %v324
      %v334 = vshrl.u32 2102212464, %v325
      %v335 = vor.u32 %v333, %v334
      %v336 = vshll.u32 2102212464, %v324
      %v337 = vshrl.u32 920167782, %v325
      %v338 = vor.u32 %v336, %v337
      %v339 = vshll.u32 920167782, %v324
      %v340 = vshrl.u32 1326507024, %v325
      %v341 = vor.u32 %v339, %v340
      %vm342 = vcmp.lt.s32.totalorder %v323, 1
      %vm343 = vcmp.lt.s32.totalorder %v323, 2
      %vm344 = vcmp.lt.s32.totalorder %v323, 3
      %vm345 = vcmp.lt.s32.totalorder %v323, 4
      %v346 = vsel %vm342, %v326, %v329
      %v347 = vsel %vm345, %v335, 2102212464
      %v348 = vsel %vm344, %v332, %v347
      %v349 = vsel %vm343, %v346, %v348
      %v350 = vsel %vm342, %v329, %v332
      %v351 = vsel %vm345, %v338, 920167782
      %v352 = vsel %vm344, %v335, %v351
      %v353 = vsel %vm343, %v350, %v352
      %v354 = vsel %vm342, %v332, %v335
      %v355 = vsel %vm345, %v341, 1326507024
      %v356 = vsel %vm344, %v338, %v355
      %v357 = vsel %vm343, %v354, %v356
      %v358 = vshll.u32 %v318, 8
      %v359 = vmul.u32.u64.compose %v358, %v357
      %v360 = vextract.low.u32 %v359
      %v361 = vextract.high.u32 %v359
      %v362 = vmul.u32.u64.compose %v358, %v353
      %v363 = vextract.low.u32 %v362
      %v364 = vextract.high.u32 %v362
      %v365 = vmul.u32 %v358, %v349
      %v366 = vadd.s32 %v361, %v363
      %vm367 = vc.u32 %v361, %v363
      %v368 = vadd.s32 %v364, 1
      %v369 = vsel %vm367, %v368, %v364
      %v370 = vadd.s32 %v365, %v369
      %v371 = vadd.s32 %v370, 536870912
      %v372 = vshrl.u32 %v371, 30
      %v373 = vshll.u32 %v372, 30
      %v374 = vsub.s32 %v370, %v373
      %vm375 = vcmp.lt.s32.totalorder %v374, 0
      %v376 = vsub.s32 0, %v374
      %v377 = vsel %vm375, %v376, %v374
      %v378 = vclz %v377
      %v379 = vsub.s32 %v378, 2
      %vm380 = vcmp.gt.s32.totalorder 0, %v379
      %v381 = vsel %vm380, 0, %v379
      %v382 = vsub.s32 32, %v381
      %v383 = vshll.u32 %v374, %v381
      %v384 = vshrl.u32 %v366, %v382
      %v385 = vor.u32 %v383, %v384
      %v386 = vsub.s32 4294967266, %v381
      %v387 = vadd.s32 %v386, 127
      %v388 = vshll.u32 %v387, 23
      %v389 = vor.u32 4788187, %v388
      %v390 = vand.u32 2147483647, %v389
      %v392 = vcvt.s32.f32 %v385
      %v393 = vmul.f32 %v392, %v390
      %v394 = vxor.u32 %v393, 2147483648
      %v395 = vsel %vm312, %v394, %v393
      %v396 = vsub.s32 4, %v372
      %v397 = vsel %vm312, %v396, %v372
      %v398 = vsel %vm311, %v204, %v395
      %v399 = vsel %vm311, 0, %v397
      %v400 = vcosq.f32.pop %v398
      %v401 = vsinq.f32.pop %v398
      %vm402 = vweird.f32 %v204
      %v403 = vand.u32 %v399, 3
      %vm404 = vcmp.lt.s32.totalorder %v403, 2
      %vm405 = vcmp.eq.s32.totalorder %v403, 0
      %v406 = vxor.u32 %v401, 2147483648
      %v407 = vsel %vm405, %v400, %v406
      %vm408 = vcmp.eq.s32.totalorder %v403, 2
      %v409 = vxor.u32 %v400, 2147483648
      %v410 = vsel %vm408, %v409, %v401
      %v411 = vsel %vm404, %v407, %v410
      %v412 = vsel %vm402, nan, %v411
      %v413 = vsel %vm205, 1, 0
      %414 = vset.pattern.permute.xlu0 1
      %415 = vperm.xlu0 %414, %v413
      %v416 = vpop.permute.xlu0 %415
      %vm417 = vcmp.eq.s32.totalorder %v416, 1
      %v418 = vsel %vm417, %v309, %v412
      %v419 = vld [vmem:[%s179] sm:$0xff]
      %v420 = vadd.f32 %v419, %v418
      %421 = vst [vmem:[%s191] sm:$0xff] %v420
      %p422 = scmp.lt.s32.totalorder %s17, 0
      %s423 = scalar_select %p422, %s17, 0
      %p424 = scmp.lt.s32.totalorder %s18, 1
      %s425 = scalar_select %p424, %s18, 1
      %s426 = smul.addr %s423, 2
      %s427 = sadd.s32 %s425, %s426
      %s428 = smul.addr %s427, 8
      %s429 = scalar_lea.vmem %s2, %s428
      // Predicated region
      $region29: #{positional_encoding_forward.1} parent=27 // pred_check
        %p430 = pneg %p99
      $region30: #{positional_encoding_forward.1} parent=27 // pred_check_branch
        %432 = sbr.rel (%p430) target = $region32
      $region31: #{positional_encoding_forward.1} parent=27 // pred_region
        _
      $region32: #{positional_encoding_forward.1} parent=27 // pred_fallthru
        _
    $region28: #{positional_encoding_forward.1} parent=5 // pred_fallthru
      _
    %p433 = scmp.le.s32.totalorder 2, %s8
    // Predicated region
    $region33: #{positional_encoding_forward.1} parent=5 // pred_check
      %p434 = pneg %p433
    $region34: #{positional_encoding_forward.1} parent=5 // pred_check_branch
      %436 = sbr.rel (%p434) target = $region36
    $region35: #{positional_encoding_forward.1} parent=5 // pred_region
      %s437 = ssub.s32 %s8, 2
      // Predicated region
      $region37: #{positional_encoding_forward.1} parent=35 // pred_check
        %p438 = pneg %p105
      $region38: #{positional_encoding_forward.1} parent=35 // pred_check_branch
        %440 = sbr.rel (%p438) target = $region40
      $region39: #{positional_encoding_forward.1} parent=35 // pred_region
        %p441 = scmp.lt.s32.totalorder %s19, 0
        %s442 = scalar_select %p441, %s19, 0
        %p443 = scmp.lt.s32.totalorder %s20, 1
        %s444 = scalar_select %p443, %s20, 1
        %s445 = smul.addr %s442, 2
        %s446 = sadd.s32 %s444, %s445
        %s447 = smul.addr %s446, 8
        %s448 = scalar_lea.vmem %s2, %s447
      $region40: #{positional_encoding_forward.1} parent=35 // pred_fallthru
        _
    $region36: #{positional_encoding_forward.1} parent=5 // pred_fallthru
      _
  $region6: #{positional_encoding_forward.1} parent=0 // loop_footer
    %s12 = sadd.s32 1, %s8
  $region7: #{positional_encoding_forward.1} parent=0 // loop_footer_branch
    %7 = sbr.rel target = $region3
  $region8: #{positional_encoding_forward.1} parent=0 // loop_exit
    _

</llo_original>
